<compile_context>
chip_gen: v7x
topology: tpu7x:2x2x1
jax: 0.10.0
libtpu: 0.0.40
codegen_flags: <defaults>
</compile_context>

<pallas_src>
import math
import jax
import jax.numpy as jnp
from jax.experimental import pallas as pl
from jax.experimental.pallas import tpu as pltpu


def _round_up(x, m):
    return ((x + m - 1) // m) * m


def _pad2(a, rows, cols):
    return jnp.pad(a, ((0, rows - a.shape[0]), (0, cols - a.shape[1])))


# ---------------------------------------------------------------------------
# Kernel: grid = (row tiles ["parallel"], d_ff tiles ["arbitrary", innermost]).
# The d_ff axis is a reduction for the second matmul, accumulated in acc_ref.
# ---------------------------------------------------------------------------
def ffn_kernel(x_ref, w1_ref, w2_ref, b1_ref, b2_ref, w3_ref, b3_ref, o_ref, acc_ref):
    # x_ref:  (tm, Dp)  compute dtype (bf16)       -- resident across the k axis
    # w1_ref: (Dp, tf)  compute dtype              -- gate branch 1, F-tile k
    # w2_ref: (Dp, tf)  compute dtype              -- gate branch 2, F-tile k
    # b1_ref: (1, tf)   float32
    # b2_ref: (1, tf)   float32
    # w3_ref: (tf, Dp)  compute dtype (LayerScale gamma folded in)
    # b3_ref: (1, Dp)   float32 (gamma folded in)  -- grid-invariant, single-buffered
    # o_ref:  (tm, Dp)  output dtype
    # acc_ref:(tm, Dp)  float32 VMEM accumulator
    k = pl.program_id(1)

    @pl.when(k == 0)
    def _():
        acc_ref[...] = jnp.zeros_like(acc_ref)

    x = x_ref[...]
    # Gate math stays in f32: sigmoid sits on the EUP slot, mul/add on the VPU slot,
    # both of which have slack while the MXU is the binding unit (and v5e has no bf16
    # VPU/EUP).
    h1 = jnp.dot(x, w1_ref[...], preferred_element_type=jnp.float32) + b1_ref[...]
    h2 = jnp.dot(x, w2_ref[...], preferred_element_type=jnp.float32) + b2_ref[...]
    gated = h1 * jax.nn.sigmoid(h2)
    acc_ref[...] += jnp.dot(gated.astype(w3_ref.dtype), w3_ref[...],
                            preferred_element_type=jnp.float32)

    @pl.when(k == pl.num_programs(1) - 1)
    def _():
        o_ref[...] = (acc_ref[...] + b3_ref[...]).astype(o_ref.dtype)


def preprocess_params(params, *, compute_dtype=jnp.bfloat16, tf=512):
    """One-time host-side preprocessing (call once, NOT per forward step):
    fold LayerScale gamma into w3/b3, cast matmul weights to the compute dtype,
    and pad d_model / d_ff up to multiples of 128 (lane-dense tiles)."""
    w1, b1, w2, b2, w3, b3, gamma = params
    d_model, d_ff = w1.shape
    Dp = _round_up(d_model, 128)
    tf = max(128, min(_round_up(tf, 128), _round_up(d_ff, 128)))
    Fp = _round_up(d_ff, tf)

    w3g = w3 * gamma          # fold LayerScale into w3
    b3g = b3 * gamma          # ... and into b3

    return {
        "w1": _pad2(w1, Dp, Fp).astype(compute_dtype),
        "w2": _pad2(w2, Dp, Fp).astype(compute_dtype),
        "b1": _pad2(b1, 1, Fp).astype(jnp.float32),
        "b2": _pad2(b2, 1, Fp).astype(jnp.float32),
        "w3": _pad2(w3g, Fp, Dp).astype(compute_dtype),
        "b3": _pad2(b3g, 1, Dp).astype(jnp.float32),
        "d_model": d_model,
        "d_ff": d_ff,
        "tf": tf,
        "compute_dtype": compute_dtype,
    }


def feed_forward(x, prepped, *, tm=256):
    """x: (batch, seq, d_model). Returns same shape / dtype.
    `prepped` comes from preprocess_params()."""
    w1, w2 = prepped["w1"], prepped["w2"]
    b1, b2 = prepped["b1"], prepped["b2"]
    w3, b3 = prepped["w3"], prepped["b3"]
    D = prepped["d_model"]
    tf = prepped["tf"]
    compute_dtype = prepped["compute_dtype"]
    Dp, Fp = w1.shape

    B, S, Dx = x.shape
    assert Dx == D, f"d_model mismatch: {Dx} vs {D}"
    M = B * S

    # Row tiling: clamp tm for tiny inputs (multiple of 16 for bf16 sublane packing),
    # pad M so the grid tiles evenly.  (On v7x, prefer Mp//tm >= 2 and even so the
    # "parallel" row axis shards across both TensorCores.)
    tm = max(16, min(tm, _round_up(M, 16)))
    Mp = _round_up(M, tm)

    x2 = x.reshape(M, D).astype(compute_dtype)
    x2 = jnp.pad(x2, ((0, Mp - M), (0, Dp - D)))

    cbytes = jnp.dtype(compute_dtype).itemsize
    obytes = jnp.dtype(x.dtype).itemsize

    # VMEM budget: per-step tiles (double-buffered), single-buffered b3, f32 accumulator,
    # plus headroom for the (tm, tf) f32 intermediates.
    vmem_need = (
        2 * tm * Dp * cbytes          # x tile
        + 2 * tm * Dp * obytes        # out tile
        + 2 * 2 * Dp * tf * cbytes    # w1, w2 F-tiles
        + 2 * tf * Dp * cbytes        # w3 F-tile
        + 2 * 2 * 8 * tf * 4          # b1, b2 (sublane-padded f32)
        + 1 * 8 * Dp * 4              # b3 (Buffered(1))
        + tm * Dp * 4                 # f32 accumulator scratch
        + 3 * tm * tf * 4             # h1 / h2 / gated f32 intermediates headroom
    )
    try:
        # 64 MiB on v7x, 128 MiB on v5e/v6e -> ~51 / ~102 MiB usable cap.
        vmem_cap = int(pltpu.get_tpu_info().vmem_capacity_bytes)
    except Exception:
        vmem_cap = 64 * 2**20         # conservative fallback (v7x-sized)
    vmem_limit = int(min(int(0.80 * vmem_cap), max(16 * 2**20, 2 * vmem_need)))

    nk = Fp // tf
    flops = 6 * Mp * Dp * Fp                   # two gate matmuls + reduction matmul
    transcendentals = Mp * Fp                  # sigmoid
    bytes_accessed = (Mp * Dp * cbytes + 2 * Dp * Fp * cbytes + 2 * Fp * 4
                      + Fp * Dp * cbytes + Dp * 4 + Mp * Dp * obytes)

    out2 = pl.pallas_call(
        ffn_kernel,
        out_shape=jax.ShapeDtypeStruct((Mp, Dp), x.dtype),
        grid_spec=pltpu.PrefetchScalarGridSpec(
            num_scalar_prefetch=0,
            grid=(Mp // tm, nk),                               # rows parallel, d_ff reduction last
            in_specs=[
                pl.BlockSpec((tm, Dp), lambda i, k: (i, 0)),   # x rows (resident across k)
                pl.BlockSpec((Dp, tf), lambda i, k: (0, k)),   # w1 F-tile
                pl.BlockSpec((Dp, tf), lambda i, k: (0, k)),   # w2 F-tile
                pl.BlockSpec((1, tf), lambda i, k: (0, k)),    # b1 F-tile
                pl.BlockSpec((1, tf), lambda i, k: (0, k)),    # b2 F-tile
                pl.BlockSpec((tf, Dp), lambda i, k: (k, 0)),   # w3 F-tile (gamma folded)
                pl.BlockSpec((1, Dp), lambda i, k: (0, 0),     # b3 (grid-invariant)
                             pipeline_mode=pl.Buffered(1)),
            ],
            out_specs=pl.BlockSpec((tm, Dp), lambda i, k: (i, 0)),
            scratch_shapes=[pltpu.VMEM((tm, Dp), jnp.float32)],
        ),
        compiler_params=pltpu.CompilerParams(
            dimension_semantics=("parallel", "arbitrary"),
            vmem_limit_bytes=vmem_limit,
        ),
        cost_estimate=pl.CostEstimate(
            flops=int(flops),
            transcendentals=int(transcendentals),
            bytes_accessed=int(bytes_accessed),
        ),
    )(x2, w1, w2, b1, b2, w3, b3)

    return out2[:M, :D].reshape(B, S, D)


def init_params(key, d_model, d_ff):
    """Deterministic init mimicking nn.Linear (uniform +/- 1/sqrt(fan_in)). Stored f32, (in, out)."""
    ks = jax.random.split(key, 6)
    lim1 = 1.0 / math.sqrt(d_model)
    lim3 = 1.0 / math.sqrt(d_ff)
    w1 = jax.random.uniform(ks[0], (d_model, d_ff), jnp.float32, -lim1, lim1)
    b1 = jax.random.uniform(ks[1], (1, d_ff), jnp.float32, -lim1, lim1)
    w2 = jax.random.uniform(ks[2], (d_model, d_ff), jnp.float32, -lim1, lim1)
    b2 = jax.random.uniform(ks[3], (1, d_ff), jnp.float32, -lim1, lim1)
    w3 = jax.random.uniform(ks[4], (d_ff, d_model), jnp.float32, -lim3, lim3)
    b3 = jax.random.uniform(ks[5], (1, d_model), jnp.float32, -lim3, lim3)
    gamma = 1e-4 * jnp.ones((1, d_model), jnp.float32)   # LayerScale init_values=0.0001
    return (w1, b1, w2, b2, w3, b3, gamma)


def feed_forward_ref(x, params, *, compute_dtype=jnp.float32):
    """Pure-JAX reference of the PyTorch module; optionally mirrors the kernel's matmul precision."""
    w1, b1, w2, b2, w3, b3, gamma = params
    cd = compute_dtype
    xc = x.astype(cd)
    h1 = jnp.dot(xc, w1.astype(cd), preferred_element_type=jnp.float32) + b1
    h2 = jnp.dot(xc, w2.astype(cd), preferred_element_type=jnp.float32) + b2
    g = h1 * jax.nn.sigmoid(h2 * 1.0)
    w3g = (w3 * gamma).astype(cd)      # gamma folded before cast, mirroring the kernel
    b3g = (b3 * gamma).astype(jnp.float32)
    return jnp.dot(g.astype(cd), w3g, preferred_element_type=jnp.float32) + b3g


if __name__ == "__main__":
    d_model = 32
    d_ff = 4 * d_model  # 128
    batch, seq = 2, 8

    key = jax.random.PRNGKey(0)
    k_x, k_p = jax.random.split(key)
    x = jax.random.normal(k_x, (batch, seq, d_model), jnp.float32)
    params = init_params(k_p, d_model, d_ff)

    # One-time parameter preprocessing (gamma folding, bf16 cast, 128-padding).
    prepped = preprocess_params(params, compute_dtype=jnp.bfloat16)

    out = jax.block_until_ready(feed_forward(x, prepped))
    assert out.shape == x.shape

    # Tight check vs. a pure-JAX reference mirroring the kernel's bf16/f32 precision.
    ref_mirror = feed_forward_ref(x, params, compute_dtype=jnp.bfloat16)
    assert jnp.allclose(out, ref_mirror, rtol=5e-3, atol=1e-7), "mismatch vs. mirrored-precision reference"

    # Loose check vs. the exact f32 module semantics (bf16 matmul error is bounded by this).
    ref_f32 = feed_forward_ref(x, params, compute_dtype=jnp.float32)
    assert jnp.allclose(out, ref_f32, rtol=1e-1, atol=2e-6), "mismatch vs. f32 module reference"

    print("KERNEL_OK")
</pallas_src>

<mosaic_0001>
module attributes {stable_mosaic.version = 11 : i64} {
  func.func @ffn_kernel(%arg0: i32, %arg1: i32, %arg2: memref<16x128xbf16, #tpu.memory_space<vmem>>, %arg3: memref<128x128xbf16, #tpu.memory_space<vmem>>, %arg4: memref<128x128xbf16, #tpu.memory_space<vmem>>, %arg5: memref<1x128xf32, #tpu.memory_space<vmem>>, %arg6: memref<1x128xf32, #tpu.memory_space<vmem>>, %arg7: memref<128x128xbf16, #tpu.memory_space<vmem>>, %arg8: memref<1x128xf32, #tpu.memory_space<vmem>>, %arg9: memref<16x128xf32, #tpu.memory_space<vmem>>, %arg10: memref<16x128xf32, #tpu.memory_space<vmem>>) attributes {dimension_semantics = [#tpu.dimension_semantics<parallel>, #tpu.dimension_semantics<arbitrary>], iteration_bounds = array<i64: 1, 1>, scalar_prefetch = 0 : i64, scratch_operands = 1 : i64, tpu.core_type = #tpu.core_type<tc>, window_params = [{transform_indices = @transform_0, window_bounds = array<i64: 16, 128>}, {transform_indices = @transform_1, window_bounds = array<i64: 128, 128>}, {transform_indices = @transform_2, window_bounds = array<i64: 128, 128>}, {transform_indices = @transform_3, window_bounds = array<i64: 1, 128>}, {transform_indices = @transform_4, window_bounds = array<i64: 1, 128>}, {transform_indices = @transform_5, window_bounds = array<i64: 128, 128>}, {pipeline_mode = #tpu.pipeline_mode<synchronous>, transform_indices = @transform_6, window_bounds = array<i64: 1, 128>}, {transform_indices = @transform_7, window_bounds = array<i64: 16, 128>}]} {
    %c0_i32 = arith.constant 0 : i32
    %0 = arith.cmpi eq, %arg1, %c0_i32 : i32
    %1 = arith.extui %0 : i1 to i32
    %c0_i32_0 = arith.constant 0 : i32
    %2 = arith.cmpi ne, %1, %c0_i32_0 : i32
    scf.if %2 {
      %cst_21 = arith.constant 0.000000e+00 : f32
      %29 = vector.broadcast %cst_21 : f32 to vector<16x128xf32>
      %c0_22 = arith.constant 0 : index
      %c0_23 = arith.constant 0 : index
      %30 = vector.load %arg10[%c0_22, %c0_23] : memref<16x128xf32, #tpu.memory_space<vmem>>, vector<16x128xf32>
      tpu.vector_store %arg10[%c0_22, %c0_23], %29 {strides = array<i32>} : memref<16x128xf32, #tpu.memory_space<vmem>>, vector<16x128xf32>,
    } else {
    }
    %c0 = arith.constant 0 : index
    %c0_1 = arith.constant 0 : index
    %3 = vector.load %arg2[%c0, %c0_1] : memref<16x128xbf16, #tpu.memory_space<vmem>>, vector<16x128xbf16>
    %c0_2 = arith.constant 0 : index
    %c0_3 = arith.constant 0 : index
    %4 = vector.load %arg3[%c0_2, %c0_3] : memref<128x128xbf16, #tpu.memory_space<vmem>>, vector<128x128xbf16>
    %cst = arith.constant dense<0.000000e+00> : vector<16x128xf32>
    %5 = tpu.matmul %3, %4, %cst {dimension_numbers = #tpu.dot_dimension_numbers<[1], [0], [0], [1], [0, 0, 1, 1], [], []>} : vector<16x128xbf16>, vector<128x128xbf16>, vector<16x128xf32> -> vector<16x128xf32>
    %c0_4 = arith.constant 0 : index
    %c0_5 = arith.constant 0 : index
    %6 = vector.load %arg5[%c0_4, %c0_5] : memref<1x128xf32, #tpu.memory_space<vmem>>, vector<1x128xf32>
    %7 = vector.broadcast %6 : vector<1x128xf32> to vector<16x128xf32>
    %8 = arith.addf %5, %7 : vector<16x128xf32>
    %c0_6 = arith.constant 0 : index
    %c0_7 = arith.constant 0 : index
    %9 = vector.load %arg4[%c0_6, %c0_7] : memref<128x128xbf16, #tpu.memory_space<vmem>>, vector<128x128xbf16>
    %cst_8 = arith.constant dense<0.000000e+00> : vector<16x128xf32>
    %10 = tpu.matmul %3, %9, %cst_8 {dimension_numbers = #tpu.dot_dimension_numbers<[1], [0], [0], [1], [0, 0, 1, 1], [], []>} : vector<16x128xbf16>, vector<128x128xbf16>, vector<16x128xf32> -> vector<16x128xf32>
    %c0_9 = arith.constant 0 : index
    %c0_10 = arith.constant 0 : index
    %11 = vector.load %arg6[%c0_9, %c0_10] : memref<1x128xf32, #tpu.memory_space<vmem>>, vector<1x128xf32>
    %12 = vector.broadcast %11 : vector<1x128xf32> to vector<16x128xf32>
    %13 = arith.addf %10, %12 : vector<16x128xf32>
    %14 = arith.negf %13 : vector<16x128xf32>
    %15 = math.exp %14 : vector<16x128xf32>
    %cst_11 = arith.constant 1.000000e+00 : f32
    %16 = vector.broadcast %cst_11 : f32 to vector<16x128xf32>
    %17 = arith.addf %16, %15 : vector<16x128xf32>
    %18 = arith.divf %16, %17 : vector<16x128xf32>
    %19 = arith.mulf %8, %18 : vector<16x128xf32>
    %c0_12 = arith.constant 0 : index
    %c0_13 = arith.constant 0 : index
    %20 = vector.load %arg10[%c0_12, %c0_13] : memref<16x128xf32, #tpu.memory_space<vmem>>, vector<16x128xf32>
    %21 = arith.truncf %19 : vector<16x128xf32> to vector<16x128xbf16>
    %c0_14 = arith.constant 0 : index
    %c0_15 = arith.constant 0 : index
    %22 = vector.load %arg7[%c0_14, %c0_15] : memref<128x128xbf16, #tpu.memory_space<vmem>>, vector<128x128xbf16>
    %cst_16 = arith.constant dense<0.000000e+00> : vector<16x128xf32>
    %23 = tpu.matmul %21, %22, %cst_16 {dimension_numbers = #tpu.dot_dimension_numbers<[1], [0], [0], [1], [0, 0, 1, 1], [], []>} : vector<16x128xbf16>, vector<128x128xbf16>, vector<16x128xf32> -> vector<16x128xf32>
    %24 = arith.addf %20, %23 : vector<16x128xf32>
    %c0_17 = arith.constant 0 : index
    %c0_18 = arith.constant 0 : index
    %25 = vector.load %arg10[%c0_17, %c0_18] : memref<16x128xf32, #tpu.memory_space<vmem>>, vector<16x128xf32>
    tpu.vector_store %arg10[%c0_17, %c0_18], %24 {strides = array<i32>} : memref<16x128xf32, #tpu.memory_space<vmem>>, vector<16x128xf32>,
    %c0_i32_19 = arith.constant 0 : i32
    %26 = arith.cmpi eq, %arg1, %c0_i32_19 : i32
    %27 = arith.extui %26 : i1 to i32
    %c0_i32_20 = arith.constant 0 : i32
    %28 = arith.cmpi ne, %27, %c0_i32_20 : i32
    scf.if %28 {
      %c0_21 = arith.constant 0 : index
      %c0_22 = arith.constant 0 : index
      %29 = vector.load %arg10[%c0_21, %c0_22] : memref<16x128xf32, #tpu.memory_space<vmem>>, vector<16x128xf32>
      %c0_23 = arith.constant 0 : index
      %c0_24 = arith.constant 0 : index
      %30 = vector.load %arg8[%c0_23, %c0_24] : memref<1x128xf32, #tpu.memory_space<vmem>>, vector<1x128xf32>
      %31 = vector.broadcast %30 : vector<1x128xf32> to vector<16x128xf32>
      %32 = arith.addf %29, %31 : vector<16x128xf32>
      %c0_25 = arith.constant 0 : index
      %c0_26 = arith.constant 0 : index
      %33 = vector.load %arg9[%c0_25, %c0_26] : memref<16x128xf32, #tpu.memory_space<vmem>>, vector<16x128xf32>
      tpu.vector_store %arg9[%c0_25, %c0_26], %32 {strides = array<i32>} : memref<16x128xf32, #tpu.memory_space<vmem>>, vector<16x128xf32>,
    } else {
    }
    return
  }
  func.func @transform_0(%arg0: i32, %arg1: i32) -> (i32, i32) {
    %c0_i32 = arith.constant 0 : i32
    %c0_i32_0 = arith.constant 0 : i32
    return %arg0, %c0_i32 : i32, i32
  }
  func.func @transform_1(%arg0: i32, %arg1: i32) -> (i32, i32) {
    %c0_i32 = arith.constant 0 : i32
    %c0_i32_0 = arith.constant 0 : i32
    return %c0_i32, %arg1 : i32, i32
  }
  func.func @transform_2(%arg0: i32, %arg1: i32) -> (i32, i32) {
    %c0_i32 = arith.constant 0 : i32
    %c0_i32_0 = arith.constant 0 : i32
    return %c0_i32, %arg1 : i32, i32
  }
  func.func @transform_3(%arg0: i32, %arg1: i32) -> (i32, i32) {
    %c0_i32 = arith.constant 0 : i32
    %c0_i32_0 = arith.constant 0 : i32
    return %c0_i32, %arg1 : i32, i32
  }
  func.func @transform_4(%arg0: i32, %arg1: i32) -> (i32, i32) {
    %c0_i32 = arith.constant 0 : i32
    %c0_i32_0 = arith.constant 0 : i32
    return %c0_i32, %arg1 : i32, i32
  }
  func.func @transform_5(%arg0: i32, %arg1: i32) -> (i32, i32) {
    %c0_i32 = arith.constant 0 : i32
    %c0_i32_0 = arith.constant 0 : i32
    return %arg1, %c0_i32 : i32, i32
  }
  func.func @transform_6(%arg0: i32, %arg1: i32) -> (i32, i32) {
    %c0_i32 = arith.constant 0 : i32
    %c0_i32_0 = arith.constant 0 : i32
    %c0_i32_1 = arith.constant 0 : i32
    return %c0_i32, %c0_i32_0 : i32, i32
  }
  func.func @transform_7(%arg0: i32, %arg1: i32) -> (i32, i32) {
    %c0_i32 = arith.constant 0 : i32
    %c0_i32_0 = arith.constant 0 : i32
    return %arg0, %c0_i32 : i32, i32
  }
}

</mosaic_0001>

<llo_original>
// kernel: tpu_custom_call.1
$region0: #{tpu_custom_call.1}
  #allocation0 [shape = 'u32[]', space=smem, size = 0x4, offset = 0x4, fixed_abs, tag = 'smem constant byte address 0x4 - core index']
  #allocation1 [shape = 'u32[144,128]{1,0:T(1,128)}', space=vmem, size = 0x12000, scoped, tag = 'internal scratch']
  #allocation2 [shape = 'f32[16,128]{1,0:T(8,128)}', space=vmem, size = 0x2000, scoped, tag = 'scratch operand']
  %s0 = inlined_call_operand.hbm [shape: bf16[16,128], index: 0, kind: input, shape index: {}]
  %s1 = inlined_call_operand.hbm [shape: bf16[128,128], index: 1, kind: input, shape index: {}]
  %s2 = inlined_call_operand.hbm [shape: bf16[128,128], index: 2, kind: input, shape index: {}]
  %s3 = inlined_call_operand.vmem [shape: f32[1,128], index: 3, kind: input, shape index: {}]
  %s4 = inlined_call_operand.vmem [shape: f32[1,128], index: 4, kind: input, shape index: {}]
  %s5 = inlined_call_operand.hbm [shape: bf16[128,128], index: 5, kind: input, shape index: {}]
  %s6 = inlined_call_operand.vmem [shape: f32[1,128], index: 6, kind: input, shape index: {}]
  %s7 = inlined_call_operand.hbm [shape: f32[16,128], index: 7, kind: output, shape index: {}]
  %s8 = sld [smem:[#allocation0]]
  $region62: #{tpu_custom_call.1} parent=0
    _
  %s10 = ssub.s32 1, %s8
  %s11 = scalar_select 0, %s10, %s8
  $region1: #{tpu_custom_call.1} parent=0
    #allocation3 [shape = 'u8[4096]{0}', space=vmem, size = 0x1000, scoped, tag = 'input window, operand 0, single buffered']
    #allocation4 [shape = 's32[1]{0}', space=sflag, size = 0x4, scoped, tag = 'scoped memory for tpu_custom_call.1']
    #allocation5 [shape = 's32[1]{0}', space=sflag, size = 0x4, scoped, tag = 'scoped memory for tpu_custom_call.1']
    #allocation6 [shape = 'u8[32768]{0}', space=vmem, size = 0x8000, scoped, tag = 'input window, operand 1, single buffered']
    #allocation7 [shape = 's32[1]{0}', space=sflag, size = 0x4, scoped, tag = 'scoped memory for tpu_custom_call.1']
    #allocation8 [shape = 'u8[32768]{0}', space=vmem, size = 0x8000, scoped, tag = 'input window, operand 2, single buffered']
    #allocation9 [shape = 'u8[32768]{0}', space=vmem, size = 0x8000, scoped, tag = 'input window, operand 5, single buffered']
    #allocation10 [shape = 's32[1]{0}', space=sflag, size = 0x4, scoped, tag = 'scoped memory for tpu_custom_call.1']
    #allocation11 [shape = 'u8[8192]{0}', space=vmem, size = 0x2000, scoped, tag = 'output window, operand 0, single buffered']
    %12 = vsyncpa [#allocation4], 0
    %13 = vsyncpa [#allocation7], 0
    %14 = vsyncpa [#allocation10], 0
    %15 = vsyncpa [#allocation5], 0
    // Predicated region
    $region2: #{tpu_custom_call.1} parent=1 // pred_check
      _
    $region3: #{tpu_custom_call.1} parent=1 // pred_check_branch
      %17 = sbr.rel (0) target = $region5
    $region4: #{tpu_custom_call.1} parent=1 // pred_region
      %s19 = ssub.s32 128, 128
      %20 = vsyncadd [#allocation4], %s19
      %s21 = sshll.u32 [#allocation3], 4
      %s22 = int_to_ptr.vmem [resolvable:$true] %s21
      %27 = dma.hbm_to_vmem [thread:$0]  %s0, 128, %s22, [#allocation4], 64, 64, 4
    $region5: #{tpu_custom_call.1} parent=1 // pred_fallthru
      _
    // Predicated region
    $region6: #{tpu_custom_call.1} parent=1 // pred_check
      _
    $region7: #{tpu_custom_call.1} parent=1 // pred_check_branch
      %29 = sbr.rel (0) target = $region9
    $region8: #{tpu_custom_call.1} parent=1 // pred_region
      %s31 = ssub.s32 1024, 1024
      %32 = vsyncadd [#allocation7], %s31
      %s33 = sshll.u32 [#allocation6], 4
      %s34 = int_to_ptr.vmem [resolvable:$true] %s33
      %39 = dma.hbm_to_vmem [thread:$0]  %s1, 1024, %s34, [#allocation7], 64, 64, 4
    $region9: #{tpu_custom_call.1} parent=1 // pred_fallthru
      _
    // Predicated region
    $region10: #{tpu_custom_call.1} parent=1 // pred_check
      _
    $region11: #{tpu_custom_call.1} parent=1 // pred_check_branch
      %41 = sbr.rel (0) target = $region13
    $region12: #{tpu_custom_call.1} parent=1 // pred_region
      %s43 = ssub.s32 1024, 1024
      %44 = vsyncadd [#allocation7], %s43
      %s45 = sshll.u32 [#allocation8], 4
      %s46 = int_to_ptr.vmem [resolvable:$true] %s45
      %51 = dma.hbm_to_vmem [thread:$0]  %s2, 1024, %s46, [#allocation7], 64, 64, 4
    $region13: #{tpu_custom_call.1} parent=1 // pred_fallthru
      _
    // Predicated region
    $region14: #{tpu_custom_call.1} parent=1 // pred_check
      _
    $region15: #{tpu_custom_call.1} parent=1 // pred_check_branch
      %53 = sbr.rel (0) target = $region17
    $region16: #{tpu_custom_call.1} parent=1 // pred_region
      _
    $region17: #{tpu_custom_call.1} parent=1 // pred_fallthru
      _
    // Predicated region
    $region18: #{tpu_custom_call.1} parent=1 // pred_check
      _
    $region19: #{tpu_custom_call.1} parent=1 // pred_check_branch
      %55 = sbr.rel (0) target = $region21
    $region20: #{tpu_custom_call.1} parent=1 // pred_region
      _
    $region21: #{tpu_custom_call.1} parent=1 // pred_fallthru
      _
    // Predicated region
    $region22: #{tpu_custom_call.1} parent=1 // pred_check
      _
    $region23: #{tpu_custom_call.1} parent=1 // pred_check_branch
      %57 = sbr.rel (0) target = $region25
    $region24: #{tpu_custom_call.1} parent=1 // pred_region
      %s59 = ssub.s32 1024, 1024
      %60 = vsyncadd [#allocation10], %s59
      %s61 = sshll.u32 [#allocation9], 4
      %s62 = int_to_ptr.vmem [resolvable:$true] %s61
      %67 = dma.hbm_to_vmem [thread:$0]  %s5, 1024, %s62, [#allocation10], 64, 64, 4
    $region25: #{tpu_custom_call.1} parent=1 // pred_fallthru
      _
    // Predicated region
    $region26: #{tpu_custom_call.1} parent=1 // pred_check
      _
    $region27: #{tpu_custom_call.1} parent=1 // pred_check_branch
      %69 = sbr.rel (0) target = $region29
    $region28: #{tpu_custom_call.1} parent=1 // pred_region
      _
    $region29: #{tpu_custom_call.1} parent=1 // pred_fallthru
      _
    // Predicated region
    $region30: #{tpu_custom_call.1} parent=1 // pred_check
      _
    $region31: #{tpu_custom_call.1} parent=1 // pred_check_branch
      %71 = sbr.rel (0) target = $region33
    $region32: #{tpu_custom_call.1} parent=1 // pred_region
      %72 = dma.done [#allocation4], 128
    $region33: #{tpu_custom_call.1} parent=1 // pred_fallthru
      _
    // Predicated region
    $region34: #{tpu_custom_call.1} parent=1 // pred_check
      _
    $region35: #{tpu_custom_call.1} parent=1 // pred_check_branch
      %74 = sbr.rel (0) target = $region37
    $region36: #{tpu_custom_call.1} parent=1 // pred_region
      %75 = dma.done [#allocation7], 1024
    $region37: #{tpu_custom_call.1} parent=1 // pred_fallthru
      _
    // Predicated region
    $region38: #{tpu_custom_call.1} parent=1 // pred_check
      _
    $region39: #{tpu_custom_call.1} parent=1 // pred_check_branch
      %77 = sbr.rel (0) target = $region41
    $region40: #{tpu_custom_call.1} parent=1 // pred_region
      %78 = dma.done [#allocation7], 1024
    $region41: #{tpu_custom_call.1} parent=1 // pred_fallthru
      _
    // Predicated region
    $region42: #{tpu_custom_call.1} parent=1 // pred_check
      _
    $region43: #{tpu_custom_call.1} parent=1 // pred_check_branch
      %80 = sbr.rel (0) target = $region45
    $region44: #{tpu_custom_call.1} parent=1 // pred_region
      %81 = dma.done [#allocation10], 1024
    $region45: #{tpu_custom_call.1} parent=1 // pred_fallthru
      _
    %p83 = scmp.eq.s32.totalorder 0, 0
    // Predicated region
    $region46: #{tpu_custom_call.1} parent=1 // pred_check
      %p84 = pneg %p83
    $region47: #{tpu_custom_call.1} parent=1 // pred_check_branch
      %86 = sbr.rel (%p84) target = $region49
    $region48: #{tpu_custom_call.1} parent=1 // pred_region
      %87 = vst [vmem:[#allocation2] sm:$0xff] 0.0
      %88 = vst [vmem:[#allocation2 + $0x8] sm:$0xff] 0.0
    $region49: #{tpu_custom_call.1} parent=1 // pred_fallthru
      _
    %v89 = vld [vmem:[#allocation3] sm:$0xf]
    %v90 = vld [vmem:[#allocation3 + $0x4] sm:$0xf]
    %v91 = vld [vmem:[#allocation6] sm:$0xf]
    %v92 = vld [vmem:[#allocation6 + $0x4] sm:$0xf]
    %v93 = vld [vmem:[#allocation6 + $0x8] sm:$0xf]
    %v94 = vld [vmem:[#allocation6 + $0xc] sm:$0xf]
    %v95 = vld [vmem:[#allocation6 + $0x10] sm:$0xf]
    %v96 = vld [vmem:[#allocation6 + $0x14] sm:$0xf]
    %v97 = vld [vmem:[#allocation6 + $0x18] sm:$0xf]
    %v98 = vld [vmem:[#allocation6 + $0x1c] sm:$0xf]
    %v99 = vld [vmem:[#allocation6 + $0x20] sm:$0xf]
    %v100 = vld [vmem:[#allocation6 + $0x24] sm:$0xf]
    %v101 = vld [vmem:[#allocation6 + $0x28] sm:$0xf]
    %v102 = vld [vmem:[#allocation6 + $0x2c] sm:$0xf]
    %v103 = vld [vmem:[#allocation6 + $0x30] sm:$0xf]
    %v104 = vld [vmem:[#allocation6 + $0x34] sm:$0xf]
    %v105 = vld [vmem:[#allocation6 + $0x38] sm:$0xf]
    %v106 = vld [vmem:[#allocation6 + $0x3c] sm:$0xf]
    %v107 = vld [vmem:[%s3] sm:$0x1]
    %v109 = vlaneseq
    %v110 = vshrl.u32 %v109, 7
    %v111 = vsub.s32 0, %v110
    %v112 = vrot.slane %v107, %v111
    %v116 = vunpack.c.l.b16 %v89
    %v117 = vunpack.c.l.b16 %v90
    %v118 = vpack.c.b16 %v117, %v116
    %v136 = vunpack.c.l.b16 %v91
    %v137 = vunpack.c.l.b16 %v92
    %v138 = vunpack.c.l.b16 %v93
    %v139 = vunpack.c.l.b16 %v94
    %v140 = vunpack.c.l.b16 %v95
    %v141 = vunpack.c.l.b16 %v96
    %v142 = vunpack.c.l.b16 %v97
    %v143 = vunpack.c.l.b16 %v98
    %v144 = vunpack.c.l.b16 %v99
    %v145 = vunpack.c.l.b16 %v100
    %v146 = vunpack.c.l.b16 %v101
    %v147 = vunpack.c.l.b16 %v102
    %v148 = vunpack.c.l.b16 %v103
    %v149 = vunpack.c.l.b16 %v104
    %v150 = vunpack.c.l.b16 %v105
    %v151 = vunpack.c.l.b16 %v106
    %v152 = vpack.c.b16 %v137, %v136
    %v153 = vpack.c.b16 %v139, %v138
    %v154 = vpack.c.b16 %v141, %v140
    %v155 = vpack.c.b16 %v143, %v142
    %v156 = vpack.c.b16 %v145, %v144
    %v157 = vpack.c.b16 %v147, %v146
    %v158 = vpack.c.b16 %v149, %v148
    %v159 = vpack.c.b16 %v151, %v150
    %168 = vmatprep.subr.bf16.mxu0 0
    %169 = vmatpush1.bf16.msra.mxu0 %v152
    %170 = vmatprep.subr.bf16.mxu0 0
    %171 = vmatpush1.bf16.msra.mxu0 %v153
    %172 = vmatprep.subr.bf16.mxu0 0
    %173 = vmatpush1.bf16.msra.mxu0 %v154
    %174 = vmatprep.subr.bf16.mxu0 0
    %175 = vmatpush1.bf16.msra.mxu0 %v155
    %176 = vmatprep.subr.bf16.mxu0 0
    %177 = vmatpush1.bf16.msra.mxu0 %v156
    %178 = vmatprep.subr.bf16.mxu0 0
    %179 = vmatpush1.bf16.msra.mxu0 %v157
    %180 = vmatprep.subr.bf16.mxu0 0
    %181 = vmatpush1.bf16.msra.mxu0 %v158
    %182 = vmatprep.subr.bf16.mxu0 0
    %183 = vmatpush1.bf16.msra.mxu0 %v159
    %184 = vmatprep.subr.bf16.mxu0 0
    %185 = vmatpush1.bf16.msra.mxu0 0
    %186 = vmatprep.subr.bf16.mxu0 0
    %187 = vmatpush1.bf16.msra.mxu0 0
    %188 = vmatprep.subr.bf16.mxu0 0
    %189 = vmatpush1.bf16.msra.mxu0 0
    %190 = vmatprep.subr.bf16.mxu0 0
    %191 = vmatpush1.bf16.msra.mxu0 0
    %192 = vmatprep.subr.bf16.mxu0 0
    %193 = vmatpush1.bf16.msra.mxu0 0
    %194 = vmatprep.subr.bf16.mxu0 0
    %195 = vmatpush1.bf16.msra.mxu0 0
    %196 = vmatprep.subr.bf16.mxu0 0
    %197 = vmatpush1.bf16.msra.mxu0 0
    %198 = vmatprep.subr.bf16.mxu0 0
    %199 = vmatpush1.bf16.msra.mxu0 0
    %200 = vmatprep.mubr.bf16.mxu0 0
    %201 = vmatmul.mubr.bf16.gmra.mrb[0].mxu0 %v118
    %v202 = vpop.f32.mrb[0].mxu0
    %v203 = vadd.f32 %v112, %v202
    %v204 = vpop.f32.mrb[0].mxu0
    %v205 = vpop.f32.mrb[0].mxu0
    %v206 = vadd.f32 %v112, %v205
    %v207 = vpop.f32.mrb[0].mxu0
    %208 = vdwg.mxu0
    %v209 = vld [vmem:[#allocation8] sm:$0xf]
    %v210 = vld [vmem:[#allocation8 + $0x4] sm:$0xf]
    %v211 = vld [vmem:[#allocation8 + $0x8] sm:$0xf]
    %v212 = vld [vmem:[#allocation8 + $0xc] sm:$0xf]
    %v213 = vld [vmem:[#allocation8 + $0x10] sm:$0xf]
    %v214 = vld [vmem:[#allocation8 + $0x14] sm:$0xf]
    %v215 = vld [vmem:[#allocation8 + $0x18] sm:$0xf]
    %v216 = vld [vmem:[#allocation8 + $0x1c] sm:$0xf]
    %v217 = vld [vmem:[#allocation8 + $0x20] sm:$0xf]
    %v218 = vld [vmem:[#allocation8 + $0x24] sm:$0xf]
    %v219 = vld [vmem:[#allocation8 + $0x28] sm:$0xf]
    %v220 = vld [vmem:[#allocation8 + $0x2c] sm:$0xf]
    %v221 = vld [vmem:[#allocation8 + $0x30] sm:$0xf]
    %v222 = vld [vmem:[#allocation8 + $0x34] sm:$0xf]
    %v223 = vld [vmem:[#allocation8 + $0x38] sm:$0xf]
    %v224 = vld [vmem:[#allocation8 + $0x3c] sm:$0xf]
    %v225 = vld [vmem:[%s4] sm:$0x1]
    %v227 = vlaneseq
    %v228 = vshrl.u32 %v227, 7
    %v229 = vsub.s32 0, %v228
    %v230 = vrot.slane %v225, %v229
    %v248 = vunpack.c.l.b16 %v209
    %v249 = vunpack.c.l.b16 %v210
    %v250 = vunpack.c.l.b16 %v211
    %v251 = vunpack.c.l.b16 %v212
    %v252 = vunpack.c.l.b16 %v213
    %v253 = vunpack.c.l.b16 %v214
    %v254 = vunpack.c.l.b16 %v215
    %v255 = vunpack.c.l.b16 %v216
    %v256 = vunpack.c.l.b16 %v217
    %v257 = vunpack.c.l.b16 %v218
    %v258 = vunpack.c.l.b16 %v219
    %v259 = vunpack.c.l.b16 %v220
    %v260 = vunpack.c.l.b16 %v221
    %v261 = vunpack.c.l.b16 %v222
    %v262 = vunpack.c.l.b16 %v223
    %v263 = vunpack.c.l.b16 %v224
    %v264 = vpack.c.b16 %v249, %v248
    %v265 = vpack.c.b16 %v251, %v250
    %v266 = vpack.c.b16 %v253, %v252
    %v267 = vpack.c.b16 %v255, %v254
    %v268 = vpack.c.b16 %v257, %v256
    %v269 = vpack.c.b16 %v259, %v258
    %v270 = vpack.c.b16 %v261, %v260
    %v271 = vpack.c.b16 %v263, %v262
    %280 = vmatprep.subr.bf16.mxu0 0
    %281 = vmatpush1.bf16.msra.mxu0 %v264
    %282 = vmatprep.subr.bf16.mxu0 0
    %283 = vmatpush1.bf16.msra.mxu0 %v265
    %284 = vmatprep.subr.bf16.mxu0 0
    %285 = vmatpush1.bf16.msra.mxu0 %v266
    %286 = vmatprep.subr.bf16.mxu0 0
    %287 = vmatpush1.bf16.msra.mxu0 %v267
    %288 = vmatprep.subr.bf16.mxu0 0
    %289 = vmatpush1.bf16.msra.mxu0 %v268
    %290 = vmatprep.subr.bf16.mxu0 0
    %291 = vmatpush1.bf16.msra.mxu0 %v269
    %292 = vmatprep.subr.bf16.mxu0 0
    %293 = vmatpush1.bf16.msra.mxu0 %v270
    %294 = vmatprep.subr.bf16.mxu0 0
    %295 = vmatpush1.bf16.msra.mxu0 %v271
    %296 = vmatprep.subr.bf16.mxu0 0
    %297 = vmatpush1.bf16.msra.mxu0 0
    %298 = vmatprep.subr.bf16.mxu0 0
    %299 = vmatpush1.bf16.msra.mxu0 0
    %300 = vmatprep.subr.bf16.mxu0 0
    %301 = vmatpush1.bf16.msra.mxu0 0
    %302 = vmatprep.subr.bf16.mxu0 0
    %303 = vmatpush1.bf16.msra.mxu0 0
    %304 = vmatprep.subr.bf16.mxu0 0
    %305 = vmatpush1.bf16.msra.mxu0 0
    %306 = vmatprep.subr.bf16.mxu0 0
    %307 = vmatpush1.bf16.msra.mxu0 0
    %308 = vmatprep.subr.bf16.mxu0 0
    %309 = vmatpush1.bf16.msra.mxu0 0
    %310 = vmatprep.subr.bf16.mxu0 0
    %311 = vmatpush1.bf16.msra.mxu0 0
    %312 = vmatprep.mubr.bf16.mxu0 0
    %313 = vmatmul.mubr.bf16.gmra.mrb[0].mxu0 %v118
    %v314 = vpop.f32.mrb[0].mxu0
    %v315 = vadd.f32 %v230, %v314
    %v316 = vpop.f32.mrb[0].mxu0
    %v317 = vpop.f32.mrb[0].mxu0
    %v318 = vadd.f32 %v230, %v317
    %v319 = vpop.f32.mrb[0].mxu0
    %320 = vdwg.mxu0
    %v321 = vxor.u32 %v315, 2147483648
    %v322 = vxor.u32 %v318, 2147483648
    %v323 = vmul.f32 %v321, 1.442695
    %v324 = vpow.pop %v323
    %v325 = vmul.f32 %v322, 1.442695
    %v326 = vpow.pop %v325
    %v327 = vadd.f32 %v324, 1.0
    %v328 = vadd.f32 %v326, 1.0
    %v329 = vrcp.pop %v327
    %v330 = vmul.f32 1.0, %v329
    %v331 = vrcp.pop %v328
    %v332 = vmul.f32 1.0, %v331
    %v333 = vmul.f32 %v203, %v330
    %v334 = vmul.f32 %v206, %v332
    %v335 = vld [vmem:[#allocation2] sm:$0xff]
    %v336 = vld [vmem:[#allocation2 + $0x8] sm:$0xff]
    %v337 = vpack.c.bf16 %v334, %v333
    %v338 = vld [vmem:[#allocation9] sm:$0xf]
    %v339 = vld [vmem:[#allocation9 + $0x4] sm:$0xf]
    %v340 = vld [vmem:[#allocation9 + $0x8] sm:$0xf]
    %v341 = vld [vmem:[#allocation9 + $0xc] sm:$0xf]
    %v342 = vld [vmem:[#allocation9 + $0x10] sm:$0xf]
    %v343 = vld [vmem:[#allocation9 + $0x14] sm:$0xf]
    %v344 = vld [vmem:[#allocation9 + $0x18] sm:$0xf]
    %v345 = vld [vmem:[#allocation9 + $0x1c] sm:$0xf]
    %v346 = vld [vmem:[#allocation9 + $0x20] sm:$0xf]
    %v347 = vld [vmem:[#allocation9 + $0x24] sm:$0xf]
    %v348 = vld [vmem:[#allocation9 + $0x28] sm:$0xf]
    %v349 = vld [vmem:[#allocation9 + $0x2c] sm:$0xf]
    %v350 = vld [vmem:[#allocation9 + $0x30] sm:$0xf]
    %v351 = vld [vmem:[#allocation9 + $0x34] sm:$0xf]
    %v352 = vld [vmem:[#allocation9 + $0x38] sm:$0xf]
    %v353 = vld [vmem:[#allocation9 + $0x3c] sm:$0xf]
    %v370 = vunpack.c.l.b16 %v338
    %v371 = vunpack.c.l.b16 %v339
    %v372 = vunpack.c.l.b16 %v340
    %v373 = vunpack.c.l.b16 %v341
    %v374 = vunpack.c.l.b16 %v342
    %v375 = vunpack.c.l.b16 %v343
    %v376 = vunpack.c.l.b16 %v344
    %v377 = vunpack.c.l.b16 %v345
    %v378 = vunpack.c.l.b16 %v346
    %v379 = vunpack.c.l.b16 %v347
    %v380 = vunpack.c.l.b16 %v348
    %v381 = vunpack.c.l.b16 %v349
    %v382 = vunpack.c.l.b16 %v350
    %v383 = vunpack.c.l.b16 %v351
    %v384 = vunpack.c.l.b16 %v352
    %v385 = vunpack.c.l.b16 %v353
    %v386 = vpack.c.b16 %v371, %v370
    %v387 = vpack.c.b16 %v373, %v372
    %v388 = vpack.c.b16 %v375, %v374
    %v389 = vpack.c.b16 %v377, %v376
    %v390 = vpack.c.b16 %v379, %v378
    %v391 = vpack.c.b16 %v381, %v380
    %v392 = vpack.c.b16 %v383, %v382
    %v393 = vpack.c.b16 %v385, %v384
    %402 = vmatprep.subr.bf16.mxu0 0
    %403 = vmatpush1.bf16.msra.mxu0 %v386
    %404 = vmatprep.subr.bf16.mxu0 0
    %405 = vmatpush1.bf16.msra.mxu0 %v387
    %406 = vmatprep.subr.bf16.mxu0 0
    %407 = vmatpush1.bf16.msra.mxu0 %v388
    %408 = vmatprep.subr.bf16.mxu0 0
    %409 = vmatpush1.bf16.msra.mxu0 %v389
    %410 = vmatprep.subr.bf16.mxu0 0
    %411 = vmatpush1.bf16.msra.mxu0 %v390
    %412 = vmatprep.subr.bf16.mxu0 0
    %413 = vmatpush1.bf16.msra.mxu0 %v391
    %414 = vmatprep.subr.bf16.mxu0 0
    %415 = vmatpush1.bf16.msra.mxu0 %v392
    %416 = vmatprep.subr.bf16.mxu0 0
    %417 = vmatpush1.bf16.msra.mxu0 %v393
    %418 = vmatprep.subr.bf16.mxu0 0
    %419 = vmatpush1.bf16.msra.mxu0 0
    %420 = vmatprep.subr.bf16.mxu0 0
    %421 = vmatpush1.bf16.msra.mxu0 0
    %422 = vmatprep.subr.bf16.mxu0 0
    %423 = vmatpush1.bf16.msra.mxu0 0
    %424 = vmatprep.subr.bf16.mxu0 0
    %425 = vmatpush1.bf16.msra.mxu0 0
    %426 = vmatprep.subr.bf16.mxu0 0
    %427 = vmatpush1.bf16.msra.mxu0 0
    %428 = vmatprep.subr.bf16.mxu0 0
    %429 = vmatpush1.bf16.msra.mxu0 0
    %430 = vmatprep.subr.bf16.mxu0 0
    %431 = vmatpush1.bf16.msra.mxu0 0
    %432 = vmatprep.subr.bf16.mxu0 0
    %433 = vmatpush1.bf16.msra.mxu0 0
    %434 = vmatprep.mubr.bf16.mxu0 0
    %435 = vmatmul.mubr.bf16.gmra.mrb[0].mxu0 %v337
    %v436 = vpop.f32.mrb[0].mxu0
    %v437 = vadd.f32 0.0, %v436
    %v438 = vpop.f32.mrb[0].mxu0
    %v439 = vpop.f32.mrb[0].mxu0
    %v440 = vadd.f32 0.0, %v439
    %v441 = vpop.f32.mrb[0].mxu0
    %442 = vdwg.mxu0
    %v443 = vadd.f32 %v335, %v437
    %v444 = vadd.f32 %v336, %v440
    %445 = vst [vmem:[#allocation2] sm:$0xff] %v443
    %446 = vst [vmem:[#allocation2 + $0x8] sm:$0xff] %v444
    // Predicated region
    $region50: #{tpu_custom_call.1} parent=1 // pred_check
      %p447 = pneg %p83
    $region51: #{tpu_custom_call.1} parent=1 // pred_check_branch
      %449 = sbr.rel (%p447) target = $region53
    $region52: #{tpu_custom_call.1} parent=1 // pred_region
      %v450 = vld [vmem:[#allocation2] sm:$0xff]
      %v451 = vld [vmem:[#allocation2 + $0x8] sm:$0xff]
      %v452 = vld [vmem:[%s6] sm:$0x1]
      %v454 = vlaneseq
      %v455 = vshrl.u32 %v454, 7
      %v456 = vsub.s32 0, %v455
      %v457 = vrot.slane %v452, %v456
      %v459 = vadd.f32 %v450, %v457
      %v460 = vadd.f32 %v451, %v457
      %461 = vst [vmem:[#allocation11] sm:$0xff] %v459
      %462 = vst [vmem:[#allocation11 + $0x8] sm:$0xff] %v460
    $region53: #{tpu_custom_call.1} parent=1 // pred_fallthru
      _
    // Predicated region
    $region54: #{tpu_custom_call.1} parent=1 // pred_check
      _
    $region55: #{tpu_custom_call.1} parent=1 // pred_check_branch
      %464 = sbr.rel (0) target = $region57
    $region56: #{tpu_custom_call.1} parent=1 // pred_region
      %s466 = ssub.s32 256, 256
      %467 = vsyncadd [#allocation5], %s466
      %s468 = sshll.u32 [#allocation11], 4
      %s469 = int_to_ptr.vmem [resolvable:$true] %s468
      %474 = dma.vmem_to_hbm [thread:$0]  %s469, 256, %s7, [#allocation5], 128, 128, 8
    $region57: #{tpu_custom_call.1} parent=1 // pred_fallthru
      _
    // Predicated region
    $region58: #{tpu_custom_call.1} parent=1 // pred_check
      _
    $region59: #{tpu_custom_call.1} parent=1 // pred_check_branch
      %476 = sbr.rel (0) target = $region61
    $region60: #{tpu_custom_call.1} parent=1 // pred_region
      %477 = dma.done [#allocation5], 256
    $region61: #{tpu_custom_call.1} parent=1 // pred_fallthru
      _
    %478 = vsyncpa [#allocation4], 1
    %479 = vsyncpa [#allocation7], 1
    %480 = vsyncpa [#allocation10], 1
    %481 = vsyncpa [#allocation5], 1

</llo_original>
